<compile_context>
chip_gen: v5e
topology: v5e:2x2
jax: 0.10.0
libtpu: 0.0.40
codegen_flags: <defaults>
</compile_context>

<pallas_src>
import jax
import jax.numpy as jnp
from jax.experimental import pallas as pl
from jax.experimental.pallas import tpu as pltpu


def _round_up(x, m):
    return ((x + m - 1) // m) * m


# ---------------------------------------------------------------------------
# Kernels
# ---------------------------------------------------------------------------
def _gather_kernel(idx_ref, tbl_ref, o_ref):
    """Pure gather: one_hot(idx) @ precomputed_table (table already includes
    scale, Linear, bias and GELU). One MXU matmul per tile, no EUP/VPU work."""
    idx = idx_ref[...]                                   # (tm, 1) int32
    tm = idx.shape[0]
    cn = tbl_ref.shape[0]
    onehot = (idx == jax.lax.broadcasted_iota(jnp.int32, (tm, cn), 1)
              ).astype(tbl_ref.dtype)                    # (tm, cn)
    o_ref[...] = jnp.dot(onehot, tbl_ref[...],
                         preferred_element_type=jnp.float32).astype(o_ref.dtype)


def _gather_gelu_kernel(idx_ref, tbl_ref, b_ref, o_ref):
    """Fused-table gather + bias + tanh-form GELU in-kernel (single fused matmul;
    used when the per-concept activation precompute is not wanted)."""
    idx = idx_ref[...]                                   # (tm, 1) int32
    tm = idx.shape[0]
    cn = tbl_ref.shape[0]
    onehot = (idx == jax.lax.broadcasted_iota(jnp.int32, (tm, cn), 1)
              ).astype(tbl_ref.dtype)                    # (tm, cn)
    h = jnp.dot(onehot, tbl_ref[...],
                preferred_element_type=jnp.float32) + b_ref[...]   # (tm, dout)
    # tanh-form GELU: one EUP push + a few VPU ops (vs exp + reciprocal + 9-op poly).
    c = jnp.float32(0.7978845608028654)                  # sqrt(2/pi)
    g = 0.5 * h * (1.0 + jnp.tanh(c * (h + 0.044715 * h * h * h)))
    o_ref[...] = g.astype(o_ref.dtype)


# ---------------------------------------------------------------------------
# Wrapper
# ---------------------------------------------------------------------------
def customized_embedding_fwd(index, emb_table, weight, bias, *, scale=1.0,
                             tm=1024, precompute_activation=True,
                             compute_dtype=jnp.float32, out_dtype=jnp.float32):
    """index: (bz, a) int; emb_table: (cn, din); weight: (dout, din) (PyTorch Linear
    layout) or None (no cpt_transform); bias: (dout,). Returns (bz, a, dout)."""
    bz, a = index.shape
    cn, din = emb_table.shape
    emb_f32 = jnp.asarray(emb_table, jnp.float32)

    # --- token-independent precompute (tiny (cn, dout) work, done once in XLA) ---
    if weight is None:
        # Module built with concept_in_dim == concept_out_dim: forward is emb(index)*scale.
        assert precompute_activation, "no-transform path uses the precomputed-table kernel"
        dout = din
        table_f32 = jnp.float32(scale) * emb_f32
        bias_row = None
    else:
        dout, din_w = weight.shape
        assert din_w == din
        w_t = jnp.asarray(weight, jnp.float32).T * jnp.float32(scale)    # (din, dout), scale folded
        fused_f32 = jnp.dot(emb_f32, w_t, precision="highest")           # (cn, dout)
        if precompute_activation:
            h = fused_f32 + jnp.asarray(bias, jnp.float32)[None, :]
            table_f32 = 0.5 * h * (1.0 + jax.scipy.special.erf(h / jnp.sqrt(2.0)))
            bias_row = None
        else:
            table_f32 = fused_f32
            bias_row = jnp.asarray(bias, jnp.float32).reshape(1, dout)

    tbl = table_f32.astype(compute_dtype)                                # (cn, dout)

    # --- token tiling ---
    n = bz * a
    out_isz = jnp.dtype(out_dtype).itemsize
    cmp_isz = jnp.dtype(compute_dtype).itemsize
    # Per-step VMEM: double-buffered output + one-hot + f32 matmul temp + idx block.
    per_row = 2 * dout * out_isz + cn * cmp_isz + dout * 4 + 2 * 4
    tm_cap = max(8, ((8 << 20) // per_row) // 8 * 8)
    n8 = _round_up(max(n, 1), 8)
    tm = max(8, min(_round_up(tm, 8), n8, tm_cap))
    # v7x has 2 TensorCores per chip: keep the (parallel) grid >= 2 steps when possible.
    if tm >= n8 and n8 >= 16:
        tm = _round_up(pl.cdiv(n8, 2), 8)
    n_pad = _round_up(n, tm)
    grid = (n_pad // tm,)

    idx_flat = jnp.asarray(index, jnp.int32).reshape(-1)
    idx_col = jnp.zeros((n_pad, 1), jnp.int32).at[:n, 0].set(idx_flat)   # pad rows -> index 0

    cparams = pltpu.CompilerParams(
        dimension_semantics=("parallel",),
        # >= v5e's 16 MiB scoped default so large tm works; well within physical VMEM
        # on all generations (per-step buffers are capped at ~8 MiB above).
        vmem_limit_bytes=32 * 1024 * 1024,
    )

    if precompute_activation:
        kernel = _gather_kernel
        extra_inputs = ()
        extra_specs = ()
    else:
        kernel = _gather_gelu_kernel
        extra_inputs = (bias_row,)
        extra_specs = (pl.BlockSpec((1, dout), lambda i: (0, 0)),)       # grid-invariant bias

    out_flat = pl.pallas_call(
        kernel,
        out_shape=jax.ShapeDtypeStruct((n_pad, dout), out_dtype),
        grid_spec=pltpu.PrefetchScalarGridSpec(
            num_scalar_prefetch=0,
            grid=grid,
            in_specs=[
                pl.BlockSpec((tm, 1), lambda i: (i, 0)),                 # token indices
                pl.BlockSpec((cn, dout), lambda i: (0, 0)),              # (pre)computed table (resident)
            ] + list(extra_specs),
            # Output block covers the full out_dim: contiguous HBM writeback of exactly
            # the useful bytes, no post-kernel column slice.
            out_specs=pl.BlockSpec((tm, dout), lambda i: (i, 0)),
        ),
        compiler_params=cparams,
    )(idx_col, tbl, *extra_inputs)

    if n_pad != n:
        out_flat = out_flat[:n]                                          # row-prefix only
    return out_flat.reshape(bz, a, dout)


# ---------------------------------------------------------------------------
# Reference + demo
# ---------------------------------------------------------------------------
def reference_fwd(index, emb_table, weight, bias, scale):
    g = emb_table[index] * scale                                         # (bz, a, din)
    h = jnp.einsum("bad,od->bao", g, weight, precision="highest") + bias # (bz, a, dout)
    return 0.5 * h * (1.0 + jax.scipy.special.erf(h / jnp.sqrt(2.0)))


if __name__ == "__main__":
    # Small shapes consistent with the module: concept_num=64, in_dim=32, out_dim=64,
    # bz=2, a=8. in_dim != out_dim so the cpt_transform + GELU path is active.
    concept_num, concept_in_dim, concept_out_dim = 64, 32, 64
    bz, a = 2, 8
    scale = 2.0
    init_range = 0.02

    key = jax.random.PRNGKey(0)
    k_emb, k_w, k_b, k_idx = jax.random.split(key, 4)

    # nn.Embedding weight: normal(0, init_range); padding_idx only affects gradients.
    emb_table = init_range * jax.random.normal(
        k_emb, (concept_num, concept_in_dim), jnp.float32)
    # nn.Linear default init: U(-1/sqrt(in), 1/sqrt(in))
    bound = 1.0 / (concept_in_dim ** 0.5)
    weight = jax.random.uniform(k_w, (concept_out_dim, concept_in_dim),
                                jnp.float32, -bound, bound)
    bias = jax.random.uniform(k_b, (concept_out_dim,), jnp.float32, -bound, bound)
    index = jax.random.randint(k_idx, (bz, a), 0, concept_num, dtype=jnp.int32)

    ref = reference_fwd(index, emb_table, weight, bias, scale)

    # Default (fastest) path: precomputed GELU table, kernel = pure one-hot gather.
    out = customized_embedding_fwd(index, emb_table, weight, bias, scale=scale)
    out = jax.block_until_ready(out)
    assert out.shape == (bz, a, concept_out_dim)
    err = float(jnp.max(jnp.abs(out - ref)))
    assert jnp.allclose(out, ref, atol=2e-3, rtol=2e-3), err

    # In-kernel fused-matmul + tanh-GELU variant (single fused table, GELU in kernel).
    out2 = customized_embedding_fwd(index, emb_table, weight, bias, scale=scale,
                                    precompute_activation=False)
    out2 = jax.block_until_ready(out2)
    err2 = float(jnp.max(jnp.abs(out2 - ref)))
    assert jnp.allclose(out2, ref, atol=2e-3, rtol=2e-3), err2

    print("KERNEL_OK")
</pallas_src>

<mosaic_0001>
module attributes {stable_mosaic.version = 11 : i64} {
  func.func @_gather_kernel(%arg0: i32, %arg1: memref<8x1xi32, #tpu.memory_space<vmem>>, %arg2: memref<64x64xf32, #tpu.memory_space<vmem>>, %arg3: memref<8x64xf32, #tpu.memory_space<vmem>>) attributes {dimension_semantics = [#tpu.dimension_semantics<parallel>], iteration_bounds = array<i64: 2>, scalar_prefetch = 0 : i64, scratch_operands = 0 : i64, tpu.core_type = #tpu.core_type<tc>, window_params = [{transform_indices = @transform_0, window_bounds = array<i64: 8, 1>}, {pipeline_mode = #tpu.pipeline_mode<synchronous>, transform_indices = @transform_1, window_bounds = array<i64: 64, 64>}, {transform_indices = @transform_2, window_bounds = array<i64: 8, 64>}]} {
    %c0 = arith.constant 0 : index
    %c0_0 = arith.constant 0 : index
    %0 = vector.load %arg1[%c0, %c0_0] : memref<8x1xi32, #tpu.memory_space<vmem>>, vector<8x1xi32>
    %1 = tpu.iota {dimensions = array<i32: 1>} : vector<8x64xi32>
    %2 = vector.broadcast %0 : vector<8x1xi32> to vector<8x64xi32>
    %3 = arith.cmpi eq, %2, %1 : vector<8x64xi32>
    %4 = arith.extui %3 : vector<8x64xi1> to vector<8x64xi32>
    %5 = arith.sitofp %4 : vector<8x64xi32> to vector<8x64xf32>
    %c0_1 = arith.constant 0 : index
    %c0_2 = arith.constant 0 : index
    %6 = vector.load %arg2[%c0_1, %c0_2] : memref<64x64xf32, #tpu.memory_space<vmem>>, vector<64x64xf32>
    %cst = arith.constant dense<0.000000e+00> : vector<8x64xf32>
    %7 = tpu.matmul %5, %6, %cst {dimension_numbers = #tpu.dot_dimension_numbers<[1], [0], [0], [1], [0, 0, 1, 1], [], []>} : vector<8x64xf32>, vector<64x64xf32>, vector<8x64xf32> -> vector<8x64xf32>
    %c0_3 = arith.constant 0 : index
    %c0_4 = arith.constant 0 : index
    %8 = vector.load %arg3[%c0_3, %c0_4] : memref<8x64xf32, #tpu.memory_space<vmem>>, vector<8x64xf32>
    tpu.vector_store %arg3[%c0_3, %c0_4], %7 {strides = array<i32>} : memref<8x64xf32, #tpu.memory_space<vmem>>, vector<8x64xf32>,
    return
  }
  func.func @transform_0(%arg0: i32) -> (i32, i32) {
    %c0_i32 = arith.constant 0 : i32
    %c0_i32_0 = arith.constant 0 : i32
    return %arg0, %c0_i32 : i32, i32
  }
  func.func @transform_1(%arg0: i32) -> (i32, i32) {
    %c0_i32 = arith.constant 0 : i32
    %c0_i32_0 = arith.constant 0 : i32
    %c0_i32_1 = arith.constant 0 : i32
    return %c0_i32, %c0_i32_0 : i32, i32
  }
  func.func @transform_2(%arg0: i32) -> (i32, i32) {
    %c0_i32 = arith.constant 0 : i32
    %c0_i32_0 = arith.constant 0 : i32
    return %arg0, %c0_i32 : i32, i32
  }
}

</mosaic_0001>

<llo_original>
// kernel: tpu_custom_call.1
$region0: #{tpu_custom_call.1}
  #allocation0 [shape = 'u32[]', space=smem, size = 0x4, offset = 0x4, fixed_abs, tag = 'smem constant byte address 0x4 - core index']
  #allocation1 [shape = 'u32[72,128]{1,0:T(1,128)}', space=vmem, size = 0x9000, scoped, tag = 'internal scratch']
  %s0 = inlined_call_operand.vmem [shape: s32[16,1], index: 0, kind: input, shape index: {}]
  %s1 = inlined_call_operand.hbm [shape: f32[64,64], index: 1, kind: input, shape index: {}]
  %s2 = inlined_call_operand.hbm [shape: f32[16,64], index: 2, kind: output, shape index: {}]
  %s3 = sld [smem:[#allocation0]]
  $region45: #{tpu_custom_call.1} parent=0
    _
  %s5 = ssub.s32 1, %s3
  %s6 = scalar_select 0, %s5, %s3
  $region1: #{tpu_custom_call.1} parent=0
    #allocation2 [shape = 'u8[32768]{0}', space=vmem, size = 0x8000, scoped, tag = 'input window, operand 1, single buffered']
    #allocation3 [shape = 's32[2]{0}', space=sflag, size = 0x8, scoped, tag = 'scoped memory for tpu_custom_call.1']
    #allocation4 [shape = 's32[2]{0}', space=sflag, size = 0x8, scoped, tag = 'scoped memory for tpu_custom_call.1']
    #allocation5 [shape = 'u8[8192]{0}', space=vmem, size = 0x2000, scoped, tag = 'output window, operand 0']
    %7 = vsyncpa [#allocation3], 0
    %8 = vsyncpa [#allocation4], 0
    %s9 = scalar_lea.sflag [#allocation4], 1
    %10 = vsyncpa %s9, 0
    loop: start=0, step=1, limit=4
    $region2: #{tpu_custom_call.1} parent=1 // loop_pre_header
      _
    $region3: #{tpu_custom_call.1} parent=1 // loop_header
      %s12 = sphi 0, %s16
      %p13 = scmp.ge.s32.totalorder %s12, 4
      %s22 = sphi 0, %s24
      %s25 = sphi 0, %s22
      %s26 = sphi 0, %s25
      %s42 = sphi 0, %s26
      %s46 = sphi 0, %s46
      %s48 = sphi 0, %s46
      %s49 = sphi 0, %s48
      %s63 = sphi 0, %s49
      %s69 = sphi 0, %s71
      %s72 = sphi 0, %s69
      %s73 = sphi 0, %s72
      %s89 = sphi 0, %s73
    $region4: #{tpu_custom_call.1} parent=1 // loop_header_branch
      %15 = sbr.rel (%p13) target = $region8
    $region5: #{tpu_custom_call.1} parent=1 // loop_body
      %s17 = ssub.s32 %s12, 1
      %s18 = ssub.s32 %s12, 2
      %s19 = sadd.s32 %s12, 1
      %s20 = ssub.s32 %s12, %s19
      %p21 = scmp.eq.s32.totalorder %s20, 0
      %s23 = sadd.s32 %s22, 1
      %s24 = scalar_select %p21, %s22, %s23
      %p27 = pneg %p21
      %p28 = scmp.eq.s32.totalorder %s12, 1
      %p29 = por %p27, %p28
      %p30 = scmp.ne.s32.totalorder %s22, %s25
      %p31 = scmp.eq.s32.totalorder %s12, 0
      %p32 = por %p30, %p31
      %p33 = scmp.ne.s32.totalorder %s22, %s25
      %p34 = scmp.eq.s32.totalorder %s17, 1
      %p35 = por %p33, %p34
      %p36 = scmp.ne.s32.totalorder %s25, %s26
      %p37 = scmp.eq.s32.totalorder %s17, 0
      %p38 = por %p36, %p37
      %p39 = scmp.ne.s32.totalorder %s25, %s26
      %p40 = scmp.eq.s32.totalorder %s18, 1
      %p41 = por %p39, %p40
      %p43 = scmp.ne.s32.totalorder %s26, %s42
      %p44 = scmp.eq.s32.totalorder %s18, 0
      %p45 = por %p43, %p44
      %s47 = sadd.s32 %s46, 1
      %p50 = scmp.eq.s32.totalorder %s12, 1
      %p51 = scmp.ne.s32.totalorder %s46, %s48
      %p52 = scmp.eq.s32.totalorder %s12, 0
      %p53 = por %p51, %p52
      %p54 = scmp.ne.s32.totalorder %s46, %s48
      %p55 = scmp.eq.s32.totalorder %s17, 1
      %p56 = por %p54, %p55
      %p57 = scmp.ne.s32.totalorder %s48, %s49
      %p58 = scmp.eq.s32.totalorder %s17, 0
      %p59 = por %p57, %p58
      %p60 = scmp.ne.s32.totalorder %s48, %s49
      %p61 = scmp.eq.s32.totalorder %s18, 1
      %p62 = por %p60, %p61
      %p64 = scmp.ne.s32.totalorder %s49, %s63
      %p65 = scmp.eq.s32.totalorder %s18, 0
      %p66 = por %p64, %p65
      %s67 = ssub.s32 %s12, %s19
      %p68 = scmp.eq.s32.totalorder %s67, 0
      %s70 = sadd.s32 %s69, 1
      %s71 = scalar_select %p68, %s69, %s70
      %p74 = pneg %p68
      %p75 = scmp.eq.s32.totalorder %s12, 1
      %p76 = por %p74, %p75
      %p77 = scmp.ne.s32.totalorder %s69, %s72
      %p78 = scmp.eq.s32.totalorder %s12, 0
      %p79 = por %p77, %p78
      %p80 = scmp.ne.s32.totalorder %s69, %s72
      %p81 = scmp.eq.s32.totalorder %s17, 1
      %p82 = por %p80, %p81
      %p83 = scmp.ne.s32.totalorder %s72, %s73
      %p84 = scmp.eq.s32.totalorder %s17, 0
      %p85 = por %p83, %p84
      %p86 = scmp.ne.s32.totalorder %s72, %s73
      %p87 = scmp.eq.s32.totalorder %s18, 1
      %p88 = por %p86, %p87
      %p90 = scmp.ne.s32.totalorder %s73, %s89
      %p91 = scmp.eq.s32.totalorder %s18, 0
      %p92 = por %p90, %p91
      %p93 = scmp.le.s32.totalorder 1, %s12
      %p94 = scmp.lt.s32.totalorder %s12, 3
      %p95 = pnand %p93, %p94
      %p96 = pneg %p95
      // Predicated region
      $region9: #{tpu_custom_call.1} parent=5 // pred_check
        _
      $region10: #{tpu_custom_call.1} parent=5 // pred_check_branch
        %98 = sbr.rel (%p95) target = $region12
      $region11: #{tpu_custom_call.1} parent=5 // pred_region
        %s99 = ssub.s32 %s12, 1
        // Predicated region
        $region13: #{tpu_custom_call.1} parent=11 // pred_check
          %p100 = pneg %p59
        $region14: #{tpu_custom_call.1} parent=11 // pred_check_branch
          %102 = sbr.rel (%p100) target = $region16
        $region15: #{tpu_custom_call.1} parent=11 // pred_region
          %104 = vsyncadd [#allocation3], 0
          %s105 = sshll.u32 %s1, 4
          %s106 = int_to_ptr.hbm [resolvable:$true] %s105
          %s107 = sshll.u32 [#allocation2], 4
          %s108 = int_to_ptr.vmem [resolvable:$true] %s107
          %113 = dma.hbm_to_vmem [thread:$0]  %s106, 1024, %s108, [#allocation3], 128, 128, 8
        $region16: #{tpu_custom_call.1} parent=11 // pred_fallthru
          _
      $region12: #{tpu_custom_call.1} parent=5 // pred_fallthru
        _
      %p114 = scmp.lt.s32.totalorder %s12, 2
      // Predicated region
      $region17: #{tpu_custom_call.1} parent=5 // pred_check
        %p115 = pneg %p114
      $region18: #{tpu_custom_call.1} parent=5 // pred_check_branch
        %117 = sbr.rel (%p115) target = $region20
      $region19: #{tpu_custom_call.1} parent=5 // pred_region
        // Predicated region
        $region21: #{tpu_custom_call.1} parent=19 // pred_check
          %p118 = pneg %p32
        $region22: #{tpu_custom_call.1} parent=19 // pred_check_branch
          %120 = sbr.rel (%p118) target = $region24
        $region23: #{tpu_custom_call.1} parent=19 // pred_region
          %p121 = scmp.lt.s32.totalorder %s12, 1
          %s122 = scalar_select %p121, %s12, 1
          %s123 = smul.addr %s122, 8
          %s124 = scalar_lea.vmem %s0, %s123
        $region24: #{tpu_custom_call.1} parent=19 // pred_fallthru
          _
      $region20: #{tpu_custom_call.1} parent=5 // pred_fallthru
        _
      %p125 = scmp.le.s32.totalorder 1, %s12
      %p126 = scmp.lt.s32.totalorder %s12, 3
      %p127 = pnand %p125, %p126
      %p128 = pneg %p127
      // Predicated region
      $region25: #{tpu_custom_call.1} parent=5 // pred_check
        _
      $region26: #{tpu_custom_call.1} parent=5 // pred_check_branch
        %130 = sbr.rel (%p127) target = $region28
      $region27: #{tpu_custom_call.1} parent=5 // pred_region
        %s131 = ssub.s32 %s12, 1
        // Predicated region
        $region29: #{tpu_custom_call.1} parent=27 // pred_check
          %p132 = pneg %p59
        $region30: #{tpu_custom_call.1} parent=27 // pred_check_branch
          %134 = sbr.rel (%p132) target = $region32
        $region31: #{tpu_custom_call.1} parent=27 // pred_region
          %136 = dma.done [#allocation3], 1024
        $region32: #{tpu_custom_call.1} parent=27 // pred_fallthru
          _
        %p137 = scmp.lt.s32.totalorder %s17, 1
        %s138 = scalar_select %p137, %s17, 1
        %s139 = smul.addr %s138, 8
        %s140 = scalar_lea.vmem %s0, %s139
        %p141 = pneg %p38
        %p142 = pneg %p35
        %p143 = pneg %p59
        %p144 = pneg %p56
        %p145 = pneg %p85
        %p146 = pneg %p82
        %s147 = sand.u32 %s72, 1
        %s148 = scalar_lea.sflag [#allocation4], %s147
        %s149 = sand.u32 %s72, 1
        %s150 = smul.addr %s149, 8
        %s151 = scalar_lea.vmem [#allocation5], %s150
        %p152 = scmp.lt.s32.totalorder %s17, 1
        %s153 = scalar_select %p152, %s17, 1
        %s154 = smul.addr %s153, 8
        %s155 = scalar_lea.vmem %s0, %s154
        %v156 = vld [vmem:[%s155] sm:$0xff]
        %v157 = vlaneseq
        %v158 = vand.u32 %v157, 127
        %159 = vset.pattern.permute.xlu0 0
        %160 = vperm.xlu0 %159, %v156
        %v161 = vpop.permute.xlu0 %160
        %vm162 = vcmp.eq.s32.totalorder %v161, %v158
        %v163 = vsel %vm162, 1, 0
        %v164 = vcvt.s32.f32 %v163
        %v165 = vld [vmem:[#allocation2] sm:$0xff]
        %v166 = vld [vmem:[#allocation2 + $0x8] sm:$0xff]
        %v167 = vld [vmem:[#allocation2 + $0x10] sm:$0xff]
        %v168 = vld [vmem:[#allocation2 + $0x18] sm:$0xff]
        %v169 = vld [vmem:[#allocation2 + $0x20] sm:$0xff]
        %v170 = vld [vmem:[#allocation2 + $0x28] sm:$0xff]
        %v171 = vld [vmem:[#allocation2 + $0x30] sm:$0xff]
        %v172 = vld [vmem:[#allocation2 + $0x38] sm:$0xff]
        %vm173 = vcmask 523264
        %v175 = vsel %vm173, %v164, 0
        %177 = vmatpush.msra.mxu0 0.0
        %178 = vmatpush.msra.mxu0 0.0
        %179 = vmatpush.msra.mxu0 0.0
        %180 = vmatpush.msra.mxu0 0.0
        %181 = vmatpush.msra.mxu0 0.0
        %182 = vmatpush.msra.mxu0 0.0
        %183 = vmatpush.msra.mxu0 0.0
        %184 = vmatpush.msra.mxu0 0.0
        %185 = vmatpush.msra.mxu0 %v172
        %186 = vmatpush.msra.mxu0 %v171
        %187 = vmatpush.msra.mxu0 %v170
        %188 = vmatpush.msra.mxu0 %v169
        %189 = vmatpush.msra.mxu0 %v168
        %190 = vmatpush.msra.mxu0 %v167
        %191 = vmatpush.msra.mxu0 %v166
        %192 = vmatpush.msra.mxu0 %v165
        %193 = vmatmul.f32.gmra.mxu0 %v175
        %v194 = vpop.f32.mrf.mxu0
        %v195 = vadd.f32 0.0, %v194
        %196 = vdwg.mxu0
        %197 = vst.msk [vmem:[%s151] sm:$0xff] %vm173, %v195
        %s198 = sand.u32 %s72, 1
        %s199 = scalar_lea.sflag [#allocation4], %s198
        %s200 = sand.u32 %s72, 1
        %s201 = smul.addr %s200, 8
        %s202 = scalar_lea.vmem [#allocation5], %s201
        // Predicated region
        $region33: #{tpu_custom_call.1} parent=27 // pred_check
          %p203 = pneg %p82
        $region34: #{tpu_custom_call.1} parent=27 // pred_check_branch
          %205 = sbr.rel (%p203) target = $region36
        $region35: #{tpu_custom_call.1} parent=27 // pred_region
          %207 = vsyncadd %s199, 0
          %s208 = smul.addr %s17, 8
          %s209 = scalar_lea.hbm %s2, %s208
          %s211 = sshll.u32 %s202, 4
          %s212 = int_to_ptr.vmem [resolvable:$true] %s211
          %s213 = sshll.u32 %s209, 4
          %s214 = int_to_ptr.hbm [resolvable:$true] %s213
          %216 = dma.vmem_to_hbm [thread:$0]  %s212, 128, %s214, %s199
        $region36: #{tpu_custom_call.1} parent=27 // pred_fallthru
          _
      $region28: #{tpu_custom_call.1} parent=5 // pred_fallthru
        _
      %p217 = scmp.le.s32.totalorder 2, %s12
      // Predicated region
      $region37: #{tpu_custom_call.1} parent=5 // pred_check
        %p218 = pneg %p217
      $region38: #{tpu_custom_call.1} parent=5 // pred_check_branch
        %220 = sbr.rel (%p218) target = $region40
      $region39: #{tpu_custom_call.1} parent=5 // pred_region
        %s221 = ssub.s32 %s12, 2
        // Predicated region
        $region41: #{tpu_custom_call.1} parent=39 // pred_check
          %p222 = pneg %p88
        $region42: #{tpu_custom_call.1} parent=39 // pred_check_branch
          %224 = sbr.rel (%p222) target = $region44
        $region43: #{tpu_custom_call.1} parent=39 // pred_region
          %s225 = sand.u32 %s73, 1
          %s226 = scalar_lea.sflag [#allocation4], %s225
          %s227 = sand.u32 %s73, 1
          %s228 = smul.addr %s227, 8
          %s229 = scalar_lea.vmem [#allocation5], %s228
          %231 = dma.done %s226, 128
        $region44: #{tpu_custom_call.1} parent=39 // pred_fallthru
          _
      $region40: #{tpu_custom_call.1} parent=5 // pred_fallthru
        _
    $region6: #{tpu_custom_call.1} parent=1 // loop_footer
      %s16 = sadd.s32 1, %s12
    $region7: #{tpu_custom_call.1} parent=1 // loop_footer_branch
      %11 = sbr.rel target = $region3
    $region8: #{tpu_custom_call.1} parent=1 // loop_exit
      _
    %232 = vsyncpa [#allocation3], 1
    %s233 = scalar_lea.sflag [#allocation3], 1
    %234 = vsyncpa %s233, 1
    %235 = vsyncpa [#allocation4], 1
    %s236 = scalar_lea.sflag [#allocation4], 1
    %237 = vsyncpa %s236, 1

</llo_original>
